<compile_context>
chip_gen: v5e
topology: v5e:2x2
jax: 0.10.0
libtpu: 0.0.40
codegen_flags: <defaults>
</compile_context>

<pallas_src>
import jax
import jax.numpy as jnp
from jax.experimental import pallas as pl
from jax.experimental.pallas import tpu as pltpu


# ---------------------------------------------------------------------------
# Stage 1: batched meta-net MLP + context shift  (one block, whole batch)
# ---------------------------------------------------------------------------
def meta_net_kernel(im_ref, w1_ref, b1_ref, w2_ref, b2_ref, ctx_ref, out_ref):
    """im_ref: (B, vis_dim)  w1: (vis_dim, hid)  b1: (1, hid)
       w2: (hid, ctx_dim)    b2: (1, ctx_dim)    ctx: (n_ctx, ctx_dim)
       out_ref: (B, n_ctx, ctx_dim) = ctx[None] + bias[:, None]"""
    x = im_ref[...]
    h = jnp.dot(x, w1_ref[...], preferred_element_type=jnp.float32) + b1_ref[...]
    h = jnp.maximum(h, 0.0)                                            # ReLU
    bias = jnp.dot(h, w2_ref[...], preferred_element_type=jnp.float32) + b2_ref[...]
    ctx_shifted = ctx_ref[...].astype(jnp.float32)[None, :, :] + bias[:, None, :]
    out_ref[...] = ctx_shifted.astype(out_ref.dtype)


# ---------------------------------------------------------------------------
# Stage 2: prompt assembly — direct slice writes into a lane-dense output
# ---------------------------------------------------------------------------
def assemble_kernel(ctxs_ref, pre_ref, suf_ref, out_ref):
    """ctxs_ref: (1, n_ctx*ctx_dim)     -- per-batch shifted context (already out dtype)
       pre_ref:  (TC, ctx_dim)          -- class-tile of token_prefix   (pass-through)
       suf_ref:  (TC, n_suf*ctx_dim)    -- class-tile of token_suffix   (pass-through)
       out_ref:  (1, TC, L*ctx_dim)     -- flattened (lane-dense) prompt rows"""
    rows = pre_ref.shape[0]
    c_pre = pre_ref.shape[1]        # ctx_dim
    c_ctx = ctxs_ref.shape[1]       # n_ctx * ctx_dim

    # Direct slice stores, native dtype — no concatenate temporary, no cast round-trip.
    out_ref[0, :, 0:c_pre] = pre_ref[...]
    out_ref[0, :, c_pre:c_pre + c_ctx] = jnp.broadcast_to(ctxs_ref[...], (rows, c_ctx))
    out_ref[0, :, c_pre + c_ctx:] = suf_ref[...]


def _pick_class_tile(n_cls, seq_len, ctx_dim, itemsize, vmem_budget_bytes=16 << 20):
    """Largest class tile whose (double-buffered in + out) blocks stay under the budget
    and that divides n_cls evenly (conservative enough for v7x's smaller VMEM)."""
    bytes_per_class_row = 4 * seq_len * ctx_dim * itemsize   # ~(in+out) x double-buffer
    tile = int(max(1, vmem_budget_bytes // bytes_per_class_row))
    tile = min(tile, n_cls)
    if tile >= 8:
        tile = (tile // 8) * 8          # prefer sublane-packed row counts
    while n_cls % tile != 0:            # avoid partial blocks
        tile -= 1
    return tile


def prompt_learner_forward(im_features, w1, b1, w2, b2, ctx,
                           token_prefix, token_suffix, *, class_tile=None):
    B, vis_dim = im_features.shape
    hid = w1.shape[1]
    n_ctx, ctx_dim = ctx.shape
    n_cls = token_prefix.shape[0]
    n_suf = token_suffix.shape[1]
    L = 1 + n_ctx + n_suf
    dtype = im_features.dtype

    # --- Stage 1: bias + context shift for the whole batch in one call ---
    ctx_shifted = pl.pallas_call(
        meta_net_kernel,
        out_shape=jax.ShapeDtypeStruct((B, n_ctx, ctx_dim), dtype),
    )(im_features, w1, b1.reshape(1, hid), w2, b2.reshape(1, ctx_dim), ctx)

    # Lane-dense, contiguous (free) reshapes for the assembly stage.
    ctx_flat = ctx_shifted.reshape(B, n_ctx * ctx_dim)
    pre2 = token_prefix.reshape(n_cls, ctx_dim).astype(dtype)
    suf2 = token_suffix.reshape(n_cls, n_suf * ctx_dim).astype(dtype)
    W = L * ctx_dim

    if class_tile is None:
        class_tile = _pick_class_tile(n_cls, L, ctx_dim, jnp.dtype(dtype).itemsize)
    tc = class_tile
    grid = (B, n_cls // tc)

    out_flat = pl.pallas_call(
        assemble_kernel,
        out_shape=jax.ShapeDtypeStruct((B, n_cls, W), dtype),
        grid_spec=pltpu.PrefetchScalarGridSpec(
            num_scalar_prefetch=0,
            grid=grid,
            in_specs=[
                pl.BlockSpec((1, n_ctx * ctx_dim), lambda b, c: (b, 0)),   # ctx_shifted (per batch)
                pl.BlockSpec((tc, ctx_dim), lambda b, c: (c, 0)),          # token_prefix tile
                pl.BlockSpec((tc, n_suf * ctx_dim), lambda b, c: (c, 0)),  # token_suffix tile
            ],
            out_specs=pl.BlockSpec((1, tc, W), lambda b, c: (b, c, 0)),
        ),
        compiler_params=pltpu.CompilerParams(
            dimension_semantics=("parallel", "parallel")),
    )(ctx_flat, pre2, suf2)

    # Contiguous reshape back to the PyTorch layout (B, n_cls, L, ctx_dim) — free.
    return out_flat.reshape(B, n_cls, L, ctx_dim)


# ---------------------------------------------------------------------------
# Pure-JAX reference mirroring the PyTorch forward
# ---------------------------------------------------------------------------
def prompt_learner_reference(im_features, w1, b1, w2, b2, ctx,
                             token_prefix, token_suffix):
    B = im_features.shape[0]
    n_ctx, ctx_dim = ctx.shape
    n_cls = token_prefix.shape[0]
    n_suf = token_suffix.shape[1]
    h = jax.nn.relu(im_features @ w1 + b1)
    bias = h @ w2 + b2                                  # (B, ctx_dim)
    ctx_shifted = ctx[None, :, :] + bias[:, None, :]    # (B, n_ctx, ctx_dim)
    ctx_b = jnp.broadcast_to(ctx_shifted[:, None], (B, n_cls, n_ctx, ctx_dim))
    pre = jnp.broadcast_to(token_prefix[None], (B, n_cls, 1, ctx_dim))
    suf = jnp.broadcast_to(token_suffix[None], (B, n_cls, n_suf, ctx_dim))
    return jnp.concatenate([pre, ctx_b.astype(im_features.dtype), suf], axis=2)


if __name__ == "__main__":
    # Small, module-consistent shapes:
    #   vis_dim = 128  -> meta_net hidden = vis_dim // 16 = 8
    #   ctx_dim = 32, n_ctx = 4 ("a photo of a"), n_cls = 3
    #   suffix length = 3  ->  seq L = 1 + 4 + 3 = 8, batch B = 2
    B, vis_dim, ctx_dim = 2, 128, 32
    hid = vis_dim // 16
    n_ctx, n_cls, n_suf = 4, 3, 3

    key = jax.random.PRNGKey(0)
    ks = jax.random.split(key, 8)
    im_features  = jax.random.normal(ks[0], (B, vis_dim), jnp.float32)
    w1           = jax.random.normal(ks[1], (vis_dim, hid), jnp.float32) * 0.05
    b1           = jax.random.normal(ks[2], (hid,), jnp.float32) * 0.02
    w2           = jax.random.normal(ks[3], (hid, ctx_dim), jnp.float32) * 0.05
    b2           = jax.random.normal(ks[4], (ctx_dim,), jnp.float32) * 0.02
    ctx          = jax.random.normal(ks[5], (n_ctx, ctx_dim), jnp.float32) * 0.02
    token_prefix = jax.random.normal(ks[6], (n_cls, 1, ctx_dim), jnp.float32) * 0.02
    token_suffix = jax.random.normal(ks[7], (n_cls, n_suf, ctx_dim), jnp.float32) * 0.02

    prompts = prompt_learner_forward(im_features, w1, b1, w2, b2, ctx,
                                     token_prefix, token_suffix)
    jax.block_until_ready(prompts)

    ref = prompt_learner_reference(im_features, w1, b1, w2, b2, ctx,
                                   token_prefix, token_suffix)

    assert prompts.shape == (B, n_cls, 1 + n_ctx + n_suf, ctx_dim), prompts.shape
    assert jnp.allclose(prompts, ref, atol=1e-5, rtol=1e-5), "mismatch vs reference"
    print("KERNEL_OK")
</pallas_src>

<mosaic_0001>
module attributes {stable_mosaic.version = 11 : i64} {
  func.func @meta_net_kernel(%arg0: memref<2x128xf32, #tpu.memory_space<vmem>>, %arg1: memref<128x8xf32, #tpu.memory_space<vmem>>, %arg2: memref<1x8xf32, #tpu.memory_space<vmem>>, %arg3: memref<8x32xf32, #tpu.memory_space<vmem>>, %arg4: memref<1x32xf32, #tpu.memory_space<vmem>>, %arg5: memref<4x32xf32, #tpu.memory_space<vmem>>, %arg6: memref<2x4x32xf32, #tpu.memory_space<vmem>>) attributes {dimension_semantics = [], scalar_prefetch = 0 : i64, scratch_operands = 0 : i64, tpu.core_type = #tpu.core_type<tc>} {
    %c0 = arith.constant 0 : index
    %c0_0 = arith.constant 0 : index
    %0 = vector.load %arg0[%c0, %c0_0] : memref<2x128xf32, #tpu.memory_space<vmem>>, vector<2x128xf32>
    %c0_1 = arith.constant 0 : index
    %c0_2 = arith.constant 0 : index
    %1 = vector.load %arg1[%c0_1, %c0_2] : memref<128x8xf32, #tpu.memory_space<vmem>>, vector<128x8xf32>
    %cst = arith.constant dense<0.000000e+00> : vector<2x8xf32>
    %2 = tpu.matmul %0, %1, %cst {dimension_numbers = #tpu.dot_dimension_numbers<[1], [0], [0], [1], [0, 0, 1, 1], [], []>} : vector<2x128xf32>, vector<128x8xf32>, vector<2x8xf32> -> vector<2x8xf32>
    %c0_3 = arith.constant 0 : index
    %c0_4 = arith.constant 0 : index
    %3 = vector.load %arg2[%c0_3, %c0_4] : memref<1x8xf32, #tpu.memory_space<vmem>>, vector<1x8xf32>
    %4 = vector.broadcast %3 : vector<1x8xf32> to vector<2x8xf32>
    %5 = arith.addf %2, %4 : vector<2x8xf32>
    %cst_5 = arith.constant 0.000000e+00 : f32
    %6 = vector.broadcast %cst_5 : f32 to vector<2x8xf32>
    %7 = arith.maximumf %5, %6 : vector<2x8xf32>
    %c0_6 = arith.constant 0 : index
    %c0_7 = arith.constant 0 : index
    %8 = vector.load %arg3[%c0_6, %c0_7] : memref<8x32xf32, #tpu.memory_space<vmem>>, vector<8x32xf32>
    %cst_8 = arith.constant dense<0.000000e+00> : vector<2x32xf32>
    %9 = tpu.matmul %7, %8, %cst_8 {dimension_numbers = #tpu.dot_dimension_numbers<[1], [0], [0], [1], [0, 0, 1, 1], [], []>} : vector<2x8xf32>, vector<8x32xf32>, vector<2x32xf32> -> vector<2x32xf32>
    %c0_9 = arith.constant 0 : index
    %c0_10 = arith.constant 0 : index
    %10 = vector.load %arg4[%c0_9, %c0_10] : memref<1x32xf32, #tpu.memory_space<vmem>>, vector<1x32xf32>
    %11 = vector.broadcast %10 : vector<1x32xf32> to vector<2x32xf32>
    %12 = arith.addf %9, %11 : vector<2x32xf32>
    %c0_11 = arith.constant 0 : index
    %c0_12 = arith.constant 0 : index
    %13 = vector.load %arg5[%c0_11, %c0_12] : memref<4x32xf32, #tpu.memory_space<vmem>>, vector<4x32xf32>
    %14 = vector.shape_cast %13 : vector<4x32xf32> to vector<1x4x32xf32>
    %15 = vector.shape_cast %12 : vector<2x32xf32> to vector<2x1x32xf32>
    %16 = vector.broadcast %14 : vector<1x4x32xf32> to vector<2x4x32xf32>
    %17 = vector.broadcast %15 : vector<2x1x32xf32> to vector<2x4x32xf32>
    %18 = arith.addf %16, %17 : vector<2x4x32xf32>
    %c0_13 = arith.constant 0 : index
    %c0_14 = arith.constant 0 : index
    %c0_15 = arith.constant 0 : index
    %19 = vector.load %arg6[%c0_13, %c0_14, %c0_15] : memref<2x4x32xf32, #tpu.memory_space<vmem>>, vector<2x4x32xf32>
    tpu.vector_store %arg6[%c0_13, %c0_14, %c0_15], %18 {strides = array<i32>} : memref<2x4x32xf32, #tpu.memory_space<vmem>>, vector<2x4x32xf32>,
    return
  }
}

</mosaic_0001>

<llo_original>
// kernel: tpu_custom_call.1
$region0: #{tpu_custom_call.1}
  #allocation0 [shape = 'u32[]', space=smem, size = 0x4, offset = 0x4, fixed_abs, tag = 'smem constant byte address 0x4 - core index']
  #allocation1 [shape = 'u32[72,128]{1,0:T(1,128)}', space=vmem, size = 0x9000, scoped, tag = 'internal scratch']
  %s0 = inlined_call_operand.vmem [shape: f32[2,128], index: 0, kind: input, shape index: {}]
  %s1 = inlined_call_operand.vmem [shape: f32[128,8], index: 1, kind: input, shape index: {}]
  %s2 = inlined_call_operand.vmem [shape: f32[1,8], index: 2, kind: input, shape index: {}]
  %s3 = inlined_call_operand.vmem [shape: f32[8,32], index: 3, kind: input, shape index: {}]
  %s4 = inlined_call_operand.vmem [shape: f32[1,32], index: 4, kind: input, shape index: {}]
  %s5 = inlined_call_operand.vmem [shape: f32[4,32], index: 5, kind: input, shape index: {}]
  %s6 = inlined_call_operand.hbm [shape: f32[2,4,32], index: 6, kind: output, shape index: {}]
  %s7 = sld [smem:[#allocation0]]
  $region34: #{tpu_custom_call.1} parent=0
    _
  %s9 = ssub.s32 1, %s7
  %s10 = scalar_select 0, %s9, %s7
  $region1: #{tpu_custom_call.1} parent=0
    #allocation2 [shape = 'u8[4096]{0}', space=vmem, size = 0x1000, scoped, tag = 'output window, operand 0, single buffered']
    #allocation3 [shape = 's32[1]{0}', space=sflag, size = 0x4, scoped, tag = 'scoped memory for tpu_custom_call.1']
    %11 = vsyncpa [#allocation3], 0
    // Predicated region
    $region2: #{tpu_custom_call.1} parent=1 // pred_check
      _
    $region3: #{tpu_custom_call.1} parent=1 // pred_check_branch
      %13 = sbr.rel (0) target = $region5
    $region4: #{tpu_custom_call.1} parent=1 // pred_region
      _
    $region5: #{tpu_custom_call.1} parent=1 // pred_fallthru
      _
    // Predicated region
    $region6: #{tpu_custom_call.1} parent=1 // pred_check
      _
    $region7: #{tpu_custom_call.1} parent=1 // pred_check_branch
      %15 = sbr.rel (0) target = $region9
    $region8: #{tpu_custom_call.1} parent=1 // pred_region
      _
    $region9: #{tpu_custom_call.1} parent=1 // pred_fallthru
      _
    // Predicated region
    $region10: #{tpu_custom_call.1} parent=1 // pred_check
      _
    $region11: #{tpu_custom_call.1} parent=1 // pred_check_branch
      %17 = sbr.rel (0) target = $region13
    $region12: #{tpu_custom_call.1} parent=1 // pred_region
      _
    $region13: #{tpu_custom_call.1} parent=1 // pred_fallthru
      _
    // Predicated region
    $region14: #{tpu_custom_call.1} parent=1 // pred_check
      _
    $region15: #{tpu_custom_call.1} parent=1 // pred_check_branch
      %19 = sbr.rel (0) target = $region17
    $region16: #{tpu_custom_call.1} parent=1 // pred_region
      _
    $region17: #{tpu_custom_call.1} parent=1 // pred_fallthru
      _
    // Predicated region
    $region18: #{tpu_custom_call.1} parent=1 // pred_check
      _
    $region19: #{tpu_custom_call.1} parent=1 // pred_check_branch
      %21 = sbr.rel (0) target = $region21
    $region20: #{tpu_custom_call.1} parent=1 // pred_region
      _
    $region21: #{tpu_custom_call.1} parent=1 // pred_fallthru
      _
    // Predicated region
    $region22: #{tpu_custom_call.1} parent=1 // pred_check
      _
    $region23: #{tpu_custom_call.1} parent=1 // pred_check_branch
      %23 = sbr.rel (0) target = $region25
    $region24: #{tpu_custom_call.1} parent=1 // pred_region
      _
    $region25: #{tpu_custom_call.1} parent=1 // pred_fallthru
      _
    %v24 = vld [vmem:[%s0] sm:$0x3]
    %v25 = vld [vmem:[%s1] sm:$0xff]
    %v26 = vld [vmem:[%s1 + $0x8] sm:$0xff]
    %v27 = vld [vmem:[%s1 + $0x10] sm:$0xff]
    %v28 = vld [vmem:[%s1 + $0x18] sm:$0xff]
    %v29 = vld [vmem:[%s1 + $0x20] sm:$0xff]
    %v30 = vld [vmem:[%s1 + $0x28] sm:$0xff]
    %v31 = vld [vmem:[%s1 + $0x30] sm:$0xff]
    %v32 = vld [vmem:[%s1 + $0x38] sm:$0xff]
    %v33 = vld [vmem:[%s1 + $0x40] sm:$0xff]
    %v34 = vld [vmem:[%s1 + $0x48] sm:$0xff]
    %v35 = vld [vmem:[%s1 + $0x50] sm:$0xff]
    %v36 = vld [vmem:[%s1 + $0x58] sm:$0xff]
    %v37 = vld [vmem:[%s1 + $0x60] sm:$0xff]
    %v38 = vld [vmem:[%s1 + $0x68] sm:$0xff]
    %v39 = vld [vmem:[%s1 + $0x70] sm:$0xff]
    %v40 = vld [vmem:[%s1 + $0x78] sm:$0xff]
    %v41 = vld [vmem:[%s2] sm:$0x1]
    %v43 = vperm.slane %v41, 0
    %45 = vmatpush.msra.mxu0 %v40
    %46 = vmatpush.msra.mxu0 %v39
    %47 = vmatpush.msra.mxu0 %v38
    %48 = vmatpush.msra.mxu0 %v37
    %49 = vmatpush.msra.mxu0 %v36
    %50 = vmatpush.msra.mxu0 %v35
    %51 = vmatpush.msra.mxu0 %v34
    %52 = vmatpush.msra.mxu0 %v33
    %53 = vmatpush.msra.mxu0 %v32
    %54 = vmatpush.msra.mxu0 %v31
    %55 = vmatpush.msra.mxu0 %v30
    %56 = vmatpush.msra.mxu0 %v29
    %57 = vmatpush.msra.mxu0 %v28
    %58 = vmatpush.msra.mxu0 %v27
    %59 = vmatpush.msra.mxu0 %v26
    %60 = vmatpush.msra.mxu0 %v25
    %61 = vmatmul.f32.gmra.mxu0 %v24
    %v62 = vpop.f32.mrf.mxu0
    %v63 = vadd.f32 %v43, %v62
    %64 = vdwg.mxu0
    %v65 = vmax.f32 %v63, 0.0
    %v66 = vld [vmem:[%s3] sm:$0xff]
    %v67 = vld [vmem:[%s4] sm:$0x1]
    %v69 = vperm.slane %v67, 0
    %vm71 = vcmask 64512
    %v73 = vsel %vm71, %v65, 0
    %75 = vmatpush.msra.mxu0 0.0
    %76 = vmatpush.msra.mxu0 0.0
    %77 = vmatpush.msra.mxu0 0.0
    %78 = vmatpush.msra.mxu0 0.0
    %79 = vmatpush.msra.mxu0 0.0
    %80 = vmatpush.msra.mxu0 0.0
    %81 = vmatpush.msra.mxu0 0.0
    %82 = vmatpush.msra.mxu0 0.0
    %83 = vmatpush.msra.mxu0 0.0
    %84 = vmatpush.msra.mxu0 0.0
    %85 = vmatpush.msra.mxu0 0.0
    %86 = vmatpush.msra.mxu0 0.0
    %87 = vmatpush.msra.mxu0 0.0
    %88 = vmatpush.msra.mxu0 0.0
    %89 = vmatpush.msra.mxu0 0.0
    %90 = vmatpush.msra.mxu0 %v66
    %91 = vmatmul.f32.gmra.mxu0 %v73
    %v92 = vpop.f32.mrf.mxu0
    %v93 = vadd.f32 %v69, %v92
    %94 = vdwg.mxu0
    %v95 = vld [vmem:[%s5] sm:$0xf]
    %v97 = vrot.slane %v93, 1
    %v98 = vperm.slane %v93, 0
    %v99 = vperm.slane %v97, 0
    %v102 = vadd.f32 %v95, %v98
    %v103 = vadd.f32 %v95, %v99
    %vm104 = vcmask 257024
    %105 = vst.msk [vmem:[#allocation2] sm:$0xf] %vm104, %v102
    %106 = vst.msk [vmem:[#allocation2 + $0x4] sm:$0xf] %vm104, %v103
    // Predicated region
    $region26: #{tpu_custom_call.1} parent=1 // pred_check
      _
    $region27: #{tpu_custom_call.1} parent=1 // pred_check_branch
      %108 = sbr.rel (0) target = $region29
    $region28: #{tpu_custom_call.1} parent=1 // pred_region
      %110 = vsyncadd [#allocation3], 0
      %s111 = sshll.u32 [#allocation2], 4
      %s112 = int_to_ptr.vmem [resolvable:$true] %s111
      %s113 = sshll.u32 %s6, 4
      %s114 = int_to_ptr.hbm [resolvable:$true] %s113
      %119 = dma.vmem_to_hbm [thread:$0]  %s112, 128, %s114, [#allocation3], 64, 64, 4
    $region29: #{tpu_custom_call.1} parent=1 // pred_fallthru
      _
    // Predicated region
    $region30: #{tpu_custom_call.1} parent=1 // pred_check
      _
    $region31: #{tpu_custom_call.1} parent=1 // pred_check_branch
      %121 = sbr.rel (0) target = $region33
    $region32: #{tpu_custom_call.1} parent=1 // pred_region
      %123 = dma.done [#allocation3], 128
    $region33: #{tpu_custom_call.1} parent=1 // pred_fallthru
      _
    %124 = vsyncpa [#allocation3], 1

</llo_original>
